<compile_context>
chip_gen: v7x
topology: tpu7x:2x2x1
jax: 0.10.0
libtpu: 0.0.40
codegen_flags: <defaults>
</compile_context>

<pallas_src>
import math

import jax
import jax.numpy as jnp
from jax.experimental import pallas as pl
from jax.experimental.pallas import tpu as pltpu


# ----------------------------- kernel bodies ---------------------------------

def _attend(m_in_ref, moT_ref, qi_ref, p_ref):
    """Scaled attention over memory centers; returns mem = m_out^T @ softmax(.)."""
    m_in = m_in_ref[0]                        # (centers, C), pre-scaled by 1/sqrt(C)
    qi = qi_ref[0]                            # (C, T_HW)

    # attention logits over memory centers (f32 accumulation on the MXU)
    s = jnp.dot(m_in, qi, preferred_element_type=jnp.float32)   # (centers, T_HW)

    # softmax over the centers axis (PyTorch dim=1), kept in f32
    s_max = jnp.max(s, axis=0, keepdims=True)
    e = jnp.exp(s - s_max)
    denom = jnp.sum(e, axis=0, keepdims=True)
    p = e * pl.reciprocal(denom, approx=False)                  # exact: tight atol

    p_ref[0] = p.astype(p_ref.dtype)                            # f32 output, full-tile store

    moT = moT_ref[0]                                            # (vd, centers)
    # second matmul in the weight dtype (bf16 inputs -> native bf16 MXU), f32 acc
    mem = jnp.dot(moT, p.astype(moT.dtype),
                  preferred_element_type=jnp.float32)           # (vd, T_HW)
    return mem


def _memory_kernel_fused(m_in_ref, moT_ref, qi_ref, qo_ref, p_ref, out_ref):
    mem = _attend(m_in_ref, moT_ref, qi_ref, p_ref)
    vd = mem.shape[0]
    # fused channel concat: [mem ; q_out]; vd is sublane-aligned (checked in wrapper)
    out_ref[0, :vd, :] = mem.astype(out_ref.dtype)
    out_ref[0, vd:, :] = qo_ref[0].astype(out_ref.dtype)


def _memory_kernel_split(m_in_ref, moT_ref, qi_ref, p_ref, mem_ref):
    mem = _attend(m_in_ref, moT_ref, qi_ref, p_ref)
    mem_ref[0] = mem.astype(mem_ref.dtype)


# ----------------------------- planning helpers -------------------------------

def _vmem_budget_bytes():
    """Generation-aware per-step VMEM budget (also used as vmem_limit_bytes)."""
    try:
        cap = pltpu.get_tpu_info().vmem_capacity_bytes
    except Exception:
        cap = 64 << 20                        # conservative (v7x-class) fallback
    if cap <= (64 << 20):                     # v7x: 64 MiB per TensorCore
        return 44 << 20
    return 56 << 20                           # v5e / v6e: 128 MiB per TensorCore


def _choose_hw_tile(HW_pad, no, centers, C, vd, qd, in_itemsize, out_itemsize,
                    fuse, budget):
    """Largest lane-dense tile dividing HW_pad that fits the per-step VMEM plan."""
    # resident (double-buffered) weight blocks: m_in + m_out^T
    resident = 2 * (centers * C + vd * centers) * in_itemsize
    out_rows = (vd + qd) if fuse else vd
    per_col = (2 * (C + (qd if fuse else 0)) * in_itemsize      # streamed inputs (x2 bufs)
               + 2 * centers * 4                                # p output, f32 (x2 bufs)
               + 2 * out_rows * out_itemsize                    # mem / concat output (x2)
               + (3 * centers + vd) * 4)                        # f32 temps: s, e, p, mem
    avail = budget - resident - (2 << 20)                       # compiler-scratch slack

    if HW_pad <= 512:
        tile = HW_pad                                           # small-problem path
    else:
        tile = 128
        for cand in (8192, 4096, 2048, 1024, 512, 256, 128):
            if HW_pad % cand == 0 and cand * per_col <= avail:
                tile = cand
                break
    # keep >= 2 total grid steps so both v7x TensorCores get work (neutral on 1-TC chips)
    while no * (HW_pad // tile) < 2 and tile % 256 == 0:
        tile //= 2
    return tile


# ----------------------------- public wrapper ---------------------------------

def memory_forward(m_in, m_out, q_in, q_out, hw_tile=None):
    no, centers, C = m_in.shape
    _, _, vd = m_out.shape
    _, Cq, H, W = q_in.shape
    _, qd, Hq, Wq = q_out.shape
    assert Cq == C, "q_in channel dim must match m_in feature dim"
    assert (Hq, Wq) == (H, W), "q_out spatial dims must match q_in"
    HW = H * W
    dtype = q_in.dtype
    in_itemsize = jnp.dtype(m_in.dtype).itemsize
    out_itemsize = jnp.dtype(dtype).itemsize

    # ---- wrapper glue (layout plumbing, not compute) ----
    # fold 1/sqrt(C) once into the tiny resident m_in (removes a per-step VPU multiply)
    m_in_s = (m_in.astype(jnp.float32) * (1.0 / math.sqrt(C))).astype(m_in.dtype)
    moT = jnp.transpose(m_out, (0, 2, 1))                 # one-time transpose -> (no, vd, centers)
    qi = q_in.reshape(no, C, HW)                          # matches torch .view(-1, C, H*W)
    qo = q_out.reshape(no, qd, HW)

    # pad HW to a multiple of 128: lane-dense unmasked stores, bounded tiles
    HW_pad = pl.cdiv(HW, 128) * 128
    if HW_pad != HW:
        pad = ((0, 0), (0, 0), (0, HW_pad - HW))
        qi = jnp.pad(qi, pad)
        qo = jnp.pad(qo, pad)

    # fused concat only when the seam row (vd) is sublane-aligned for the out dtype
    sublane = (8 * 4) // out_itemsize                     # 8 f32 / 16 bf16 / 32 int8
    fuse = (vd % sublane) == 0

    budget = _vmem_budget_bytes()
    if hw_tile is None:
        hw_tile = _choose_hw_tile(HW_pad, no, centers, C, vd, qd,
                                  in_itemsize, out_itemsize, fuse, budget)
    assert HW_pad % hw_tile == 0 and hw_tile % 128 == 0, "hw_tile must be lane-dense"
    n_hw = HW_pad // hw_tile

    out_rows = (vd + qd) if fuse else vd
    cost = pl.CostEstimate(
        flops=2 * no * HW_pad * centers * (C + vd),
        transcendentals=no * centers * HW_pad,
        bytes_accessed=((m_in_s.size + moT.size) * in_itemsize
                        + (qi.size + (qo.size if fuse else 0)) * out_itemsize
                        + no * centers * HW_pad * 4
                        + no * out_rows * HW_pad * out_itemsize),
    )

    compiler_params = pltpu.CompilerParams(
        dimension_semantics=("parallel", "parallel"),
        vmem_limit_bytes=budget)

    in_specs_common = [
        pl.BlockSpec((1, centers, C), lambda b, h: (b, 0, 0)),    # resident per batch
        pl.BlockSpec((1, vd, centers), lambda b, h: (b, 0, 0)),   # resident per batch
        pl.BlockSpec((1, C, hw_tile), lambda b, h: (b, 0, h)),    # streamed
    ]
    p_spec = pl.BlockSpec((1, centers, hw_tile), lambda b, h: (b, 0, h))

    if fuse:
        p_pad, cat_pad = pl.pallas_call(
            _memory_kernel_fused,
            out_shape=(jax.ShapeDtypeStruct((no, centers, HW_pad), jnp.float32),
                       jax.ShapeDtypeStruct((no, vd + qd, HW_pad), dtype)),
            grid_spec=pltpu.PrefetchScalarGridSpec(
                num_scalar_prefetch=0,
                grid=(no, n_hw),
                in_specs=in_specs_common + [
                    pl.BlockSpec((1, qd, hw_tile), lambda b, h: (b, 0, h)),
                ],
                out_specs=[
                    p_spec,
                    pl.BlockSpec((1, vd + qd, hw_tile), lambda b, h: (b, 0, h)),
                ],
            ),
            compiler_params=compiler_params,
            cost_estimate=cost,
        )(m_in_s, moT, qi, qo)
        p = p_pad[..., :HW] if HW_pad != HW else p_pad
        cat = cat_pad[..., :HW] if HW_pad != HW else cat_pad
        mem_out = cat.reshape(no, vd + qd, H, W)
    else:
        # seam not sublane-aligned: emit mem alone (full-tile stores), concat in XLA
        p_pad, mem_pad = pl.pallas_call(
            _memory_kernel_split,
            out_shape=(jax.ShapeDtypeStruct((no, centers, HW_pad), jnp.float32),
                       jax.ShapeDtypeStruct((no, vd, HW_pad), dtype)),
            grid_spec=pltpu.PrefetchScalarGridSpec(
                num_scalar_prefetch=0,
                grid=(no, n_hw),
                in_specs=in_specs_common,
                out_specs=[
                    p_spec,
                    pl.BlockSpec((1, vd, hw_tile), lambda b, h: (b, 0, h)),
                ],
            ),
            compiler_params=compiler_params,
            cost_estimate=cost,
        )(m_in_s, moT, qi)
        p = p_pad[..., :HW] if HW_pad != HW else p_pad
        mem = mem_pad[..., :HW] if HW_pad != HW else mem_pad
        mem_out = jnp.concatenate(
            [mem.reshape(no, vd, H, W), q_out.astype(dtype)], axis=1)

    # NOTE: p is returned in f32 (exact softmax weights); mem_out follows the input dtype.
    return mem_out, p


# ----------------------------- test ------------------------------------------

def _reference(m_in, m_out, q_in, q_out):
    """Pure-JAX f32 reference of the PyTorch forward."""
    no, centers, C = m_in.shape
    vd = m_out.shape[2]
    H, W = q_in.shape[2], q_in.shape[3]
    qi = q_in.astype(jnp.float32).reshape(no, C, H * W)
    s = jnp.einsum('bkc,bch->bkh', m_in.astype(jnp.float32), qi) / math.sqrt(C)
    p = jax.nn.softmax(s, axis=1)
    mem = jnp.einsum('bkv,bkh->bvh', m_out.astype(jnp.float32), p).reshape(no, vd, H, W)
    mem_out = jnp.concatenate([mem, q_out.astype(jnp.float32)], axis=1)
    return mem_out, p


if __name__ == "__main__":
    key = jax.random.PRNGKey(0)
    k1, k2, k3, k4 = jax.random.split(key, 4)

    # ---- primary shapes: HW=256 (lane-dense), sublane-aligned vd -> fused concat ----
    no, centers, C, vd, qd, H, W = 2, 8, 32, 16, 16, 16, 16
    m_in = jax.random.normal(k1, (no, centers, C), jnp.float32)
    m_out = jax.random.normal(k2, (no, centers, vd), jnp.float32)
    q_in = jax.random.normal(k3, (no, C, H, W), jnp.float32)
    q_out = jax.random.normal(k4, (no, qd, H, W), jnp.float32)
    mem_out_ref, p_ref = _reference(m_in, m_out, q_in, q_out)

    # f32 path, explicit hw_tile=128 -> exercises the (batch x HW-tile) grid (2, 2)
    mem_out, p = memory_forward(m_in, m_out, q_in, q_out, hw_tile=128)
    jax.block_until_ready((mem_out, p))
    assert p.shape == (no, centers, H * W) and p.dtype == jnp.float32
    assert mem_out.shape == (no, vd + qd, H, W)
    assert jnp.allclose(p, p_ref, atol=5e-5), "softmax weights mismatch (f32)"
    assert jnp.allclose(mem_out, mem_out_ref, atol=5e-4), "memory readout mismatch (f32)"

    # bf16 I/O path (recommended production dtype: kernel is HBM-bound, ~2x fewer bytes)
    mem_out_bf, p_bf = memory_forward(
        m_in.astype(jnp.bfloat16), m_out.astype(jnp.bfloat16),
        q_in.astype(jnp.bfloat16), q_out.astype(jnp.bfloat16))
    jax.block_until_ready((mem_out_bf, p_bf))
    assert mem_out_bf.dtype == jnp.bfloat16 and p_bf.dtype == jnp.float32
    assert jnp.allclose(p_bf, p_ref, atol=6e-2), "softmax weights mismatch (bf16)"
    assert jnp.allclose(mem_out_bf.astype(jnp.float32), mem_out_ref, atol=6e-2), \
        "memory readout mismatch (bf16)"

    # non-128-divisible HW (10x10 -> padded to 128) + misaligned vd -> split fallback
    no2, centers2, C2, vd2, qd2, H2, W2 = 2, 8, 32, 12, 16, 10, 10
    j1, j2, j3, j4 = jax.random.split(jax.random.PRNGKey(1), 4)
    m_in2 = jax.random.normal(j1, (no2, centers2, C2), jnp.float32)
    m_out2 = jax.random.normal(j2, (no2, centers2, vd2), jnp.float32)
    q_in2 = jax.random.normal(j3, (no2, C2, H2, W2), jnp.float32)
    q_out2 = jax.random.normal(j4, (no2, qd2, H2, W2), jnp.float32)
    mem_out2_ref, p2_ref = _reference(m_in2, m_out2, q_in2, q_out2)
    mem_out2, p2 = memory_forward(m_in2, m_out2, q_in2, q_out2)
    jax.block_until_ready((mem_out2, p2))
    assert mem_out2.shape == (no2, vd2 + qd2, H2, W2)
    assert p2.shape == (no2, centers2, H2 * W2)
    assert jnp.allclose(p2, p2_ref, atol=5e-5), "softmax weights mismatch (padded/split)"
    assert jnp.allclose(mem_out2, mem_out2_ref, atol=5e-4), \
        "memory readout mismatch (padded/split)"

    print("KERNEL_OK")
</pallas_src>

<mosaic_0001>
module attributes {stable_mosaic.version = 11 : i64} {
  func.func @_memory_kernel_fused(%arg0: i32, %arg1: i32, %arg2: memref<1x8x32xf32, #tpu.memory_space<vmem>>, %arg3: memref<1x16x8xf32, #tpu.memory_space<vmem>>, %arg4: memref<1x32x128xf32, #tpu.memory_space<vmem>>, %arg5: memref<1x16x128xf32, #tpu.memory_space<vmem>>, %arg6: memref<1x8x128xf32, #tpu.memory_space<vmem>>, %arg7: memref<1x32x128xf32, #tpu.memory_space<vmem>>) attributes {dimension_semantics = [#tpu.dimension_semantics<parallel>, #tpu.dimension_semantics<parallel>], iteration_bounds = array<i64: 2, 2>, scalar_prefetch = 0 : i64, scratch_operands = 0 : i64, tpu.core_type = #tpu.core_type<tc>, window_params = [{transform_indices = @transform_0, window_bounds = array<i64: 1, 8, 32>}, {transform_indices = @transform_1, window_bounds = array<i64: 1, 16, 8>}, {transform_indices = @transform_2, window_bounds = array<i64: 1, 32, 128>}, {transform_indices = @transform_3, window_bounds = array<i64: 1, 16, 128>}, {transform_indices = @transform_4, window_bounds = array<i64: 1, 8, 128>}, {transform_indices = @transform_5, window_bounds = array<i64: 1, 32, 128>}]} {
    %c0 = arith.constant 0 : index
    %c0_0 = arith.constant 0 : index
    %c0_1 = arith.constant 0 : index
    %0 = vector.load %arg2[%c0, %c0_0, %c0_1] : memref<1x8x32xf32, #tpu.memory_space<vmem>>, vector<1x8x32xf32>
    %1 = vector.shape_cast %0 : vector<1x8x32xf32> to vector<8x32xf32>
    %c0_2 = arith.constant 0 : index
    %c0_3 = arith.constant 0 : index
    %c0_4 = arith.constant 0 : index
    %2 = vector.load %arg4[%c0_2, %c0_3, %c0_4] : memref<1x32x128xf32, #tpu.memory_space<vmem>>, vector<1x32x128xf32>
    %3 = vector.shape_cast %2 : vector<1x32x128xf32> to vector<32x128xf32>
    %cst = arith.constant dense<0.000000e+00> : vector<8x128xf32>
    %4 = tpu.matmul %1, %3, %cst {dimension_numbers = #tpu.dot_dimension_numbers<[1], [0], [0], [1], [0, 0, 1, 1], [], []>} : vector<8x32xf32>, vector<32x128xf32>, vector<8x128xf32> -> vector<8x128xf32>
    %cst_5 = arith.constant dense<0xFF800000> : vector<128xf32>
    %5 = vector.multi_reduction <maximumf>, %4, %cst_5 [0] : vector<8x128xf32> to vector<128xf32>
    %6 = vector.shape_cast %5 : vector<128xf32> to vector<1x128xf32>
    %7 = vector.broadcast %6 : vector<1x128xf32> to vector<8x128xf32>
    %8 = arith.subf %4, %7 : vector<8x128xf32>
    %9 = math.exp %8 : vector<8x128xf32>
    %cst_6 = arith.constant dense<0.000000e+00> : vector<128xf32>
    %10 = vector.multi_reduction <add>, %9, %cst_6 [0] : vector<8x128xf32> to vector<128xf32>
    %11 = vector.shape_cast %10 : vector<128xf32> to vector<1x128xf32>
    %12 = tpu.reciprocal %11 : vector<1x128xf32> -> vector<1x128xf32>
    %13 = vector.broadcast %12 : vector<1x128xf32> to vector<8x128xf32>
    %14 = arith.mulf %9, %13 : vector<8x128xf32>
    %c0_7 = arith.constant 0 : index
    %c0_8 = arith.constant 0 : index
    %c0_9 = arith.constant 0 : index
    %15 = vector.load %arg6[%c0_7, %c0_8, %c0_9] : memref<1x8x128xf32, #tpu.memory_space<vmem>>, vector<1x8x128xf32>
    %16 = vector.shape_cast %15 : vector<1x8x128xf32> to vector<8x128xf32>
    %17 = vector.shape_cast %14 : vector<8x128xf32> to vector<1x8x128xf32>
    tpu.vector_store %arg6[%c0_7, %c0_8, %c0_9], %17 {strides = array<i32>} : memref<1x8x128xf32, #tpu.memory_space<vmem>>, vector<1x8x128xf32>,
    %c0_10 = arith.constant 0 : index
    %c0_11 = arith.constant 0 : index
    %c0_12 = arith.constant 0 : index
    %18 = vector.load %arg3[%c0_10, %c0_11, %c0_12] : memref<1x16x8xf32, #tpu.memory_space<vmem>>, vector<1x16x8xf32>
    %19 = vector.shape_cast %18 : vector<1x16x8xf32> to vector<16x8xf32>
    %cst_13 = arith.constant dense<0.000000e+00> : vector<16x128xf32>
    %20 = tpu.matmul %19, %14, %cst_13 {dimension_numbers = #tpu.dot_dimension_numbers<[1], [0], [0], [1], [0, 0, 1, 1], [], []>} : vector<16x8xf32>, vector<8x128xf32>, vector<16x128xf32> -> vector<16x128xf32>
    %c0_14 = arith.constant 0 : index
    %c0_15 = arith.constant 0 : index
    %c0_16 = arith.constant 0 : index
    %21 = vector.load %arg7[%c0_14, %c0_15, %c0_16] : memref<1x32x128xf32, #tpu.memory_space<vmem>>, vector<1x16x128xf32>
    %22 = vector.shape_cast %21 : vector<1x16x128xf32> to vector<16x128xf32>
    %23 = vector.shape_cast %20 : vector<16x128xf32> to vector<1x16x128xf32>
    tpu.vector_store %arg7[%c0_14, %c0_15, %c0_16], %23 {strides = array<i32>} : memref<1x32x128xf32, #tpu.memory_space<vmem>>, vector<1x16x128xf32>,
    %c0_17 = arith.constant 0 : index
    %c0_18 = arith.constant 0 : index
    %c0_19 = arith.constant 0 : index
    %24 = vector.load %arg5[%c0_17, %c0_18, %c0_19] : memref<1x16x128xf32, #tpu.memory_space<vmem>>, vector<1x16x128xf32>
    %25 = vector.shape_cast %24 : vector<1x16x128xf32> to vector<16x128xf32>
    %c0_20 = arith.constant 0 : index
    %c16 = arith.constant 16 : index
    %c0_21 = arith.constant 0 : index
    %26 = vector.load %arg7[%c0_20, %c16, %c0_21] : memref<1x32x128xf32, #tpu.memory_space<vmem>>, vector<1x16x128xf32>
    %27 = vector.shape_cast %26 : vector<1x16x128xf32> to vector<16x128xf32>
    %28 = vector.shape_cast %25 : vector<16x128xf32> to vector<1x16x128xf32>
    tpu.vector_store %arg7[%c0_20, %c16, %c0_21], %28 {strides = array<i32>} : memref<1x32x128xf32, #tpu.memory_space<vmem>>, vector<1x16x128xf32>,
    return
  }
  func.func @transform_0(%arg0: i32, %arg1: i32) -> (i32, i32, i32) {
    %c0_i32 = arith.constant 0 : i32
    %c0_i32_0 = arith.constant 0 : i32
    %c0_i32_1 = arith.constant 0 : i32
    return %arg0, %c0_i32, %c0_i32_0 : i32, i32, i32
  }
  func.func @transform_1(%arg0: i32, %arg1: i32) -> (i32, i32, i32) {
    %c0_i32 = arith.constant 0 : i32
    %c0_i32_0 = arith.constant 0 : i32
    %c0_i32_1 = arith.constant 0 : i32
    return %arg0, %c0_i32, %c0_i32_0 : i32, i32, i32
  }
  func.func @transform_2(%arg0: i32, %arg1: i32) -> (i32, i32, i32) {
    %c0_i32 = arith.constant 0 : i32
    %c0_i32_0 = arith.constant 0 : i32
    return %arg0, %c0_i32, %arg1 : i32, i32, i32
  }
  func.func @transform_3(%arg0: i32, %arg1: i32) -> (i32, i32, i32) {
    %c0_i32 = arith.constant 0 : i32
    %c0_i32_0 = arith.constant 0 : i32
    return %arg0, %c0_i32, %arg1 : i32, i32, i32
  }
  func.func @transform_4(%arg0: i32, %arg1: i32) -> (i32, i32, i32) {
    %c0_i32 = arith.constant 0 : i32
    %c0_i32_0 = arith.constant 0 : i32
    return %arg0, %c0_i32, %arg1 : i32, i32, i32
  }
  func.func @transform_5(%arg0: i32, %arg1: i32) -> (i32, i32, i32) {
    %c0_i32 = arith.constant 0 : i32
    %c0_i32_0 = arith.constant 0 : i32
    return %arg0, %c0_i32, %arg1 : i32, i32, i32
  }
}

</mosaic_0001>

<llo_original>
// kernel: tpu_custom_call.1
$region0: #{tpu_custom_call.1}
  #allocation0 [shape = 'u32[]', space=smem, size = 0x4, offset = 0x4, fixed_abs, tag = 'smem constant byte address 0x4 - core index']
  #allocation1 [shape = 'u32[144,128]{1,0:T(1,128)}', space=vmem, size = 0x12000, scoped, tag = 'internal scratch']
  %s0 = inlined_call_operand.vmem [shape: f32[2,8,32], index: 0, kind: input, shape index: {}]
  %s1 = inlined_call_operand.vmem [shape: f32[2,16,8], index: 1, kind: input, shape index: {}]
  %s2 = inlined_call_operand.hbm [shape: f32[2,32,256], index: 2, kind: input, shape index: {}]
  %s3 = inlined_call_operand.hbm [shape: f32[2,16,256], index: 3, kind: input, shape index: {}]
  %s4 = inlined_call_operand.hbm [shape: f32[2,8,256], index: 4, kind: output, shape index: {0}]
  %s5 = inlined_call_operand.hbm [shape: f32[2,32,256], index: 5, kind: output, shape index: {1}]
  %6 = xla_tuple %s4, %s5
  %s7 = sld [smem:[#allocation0]]
  $region65: #{tpu_custom_call.1} parent=0
    _
  %s9 = ssub.s32 1, %s7
  %s10 = scalar_select 0, %s9, %s7
  $region1: #{tpu_custom_call.1} parent=0
    #allocation2 [shape = 'u8[32768]{0}', space=vmem, size = 0x8000, scoped, tag = 'input window, operand 2']
    #allocation3 [shape = 's32[2]{0}', space=sflag, size = 0x8, scoped, tag = 'scoped memory for tpu_custom_call.1']
    #allocation4 [shape = 's32[2]{0}', space=sflag, size = 0x8, scoped, tag = 'scoped memory for tpu_custom_call.1']
    #allocation5 [shape = 'u8[16384]{0}', space=vmem, size = 0x4000, scoped, tag = 'input window, operand 3']
    #allocation6 [shape = 's32[2]{0}', space=sflag, size = 0x8, scoped, tag = 'scoped memory for tpu_custom_call.1']
    #allocation7 [shape = 'u8[8192]{0}', space=vmem, size = 0x2000, scoped, tag = 'output window, operand 0']
    #allocation8 [shape = 'u8[32768]{0}', space=vmem, size = 0x8000, scoped, tag = 'output window, operand 1']
    #allocation9 [shape = 's32[2]{0}', space=sflag, size = 0x8, scoped, tag = 'scoped memory for tpu_custom_call.1']
    %11 = vsyncpa [#allocation3], 0
    %s12 = scalar_lea.sflag [#allocation3], 1
    %13 = vsyncpa %s12, 0
    %14 = vsyncpa [#allocation6], 0
    %s15 = scalar_lea.sflag [#allocation6], 1
    %16 = vsyncpa %s15, 0
    %17 = vsyncpa [#allocation4], 0
    %s18 = scalar_lea.sflag [#allocation4], 1
    %19 = vsyncpa %s18, 0
    %20 = vsyncpa [#allocation9], 0
    %s21 = scalar_lea.sflag [#allocation9], 1
    %22 = vsyncpa %s21, 0
    loop: start=0, step=1, limit=6
    $region2: #{tpu_custom_call.1} parent=1 // loop_pre_header
      _
    $region3: #{tpu_custom_call.1} parent=1 // loop_header
      %s24 = sphi 0, %s28
      %p25 = scmp.ge.s32.totalorder %s24, 6
      %s31 = sphi 0, %s43
      %s32 = sphi 0, %s39
      %s33 = sphi 0, %s31
      %s34 = sphi 0, %s32
      %s35 = sphi 0, %s33
      %s36 = sphi 0, %s34
      %s46 = sphi 0, %s48
      %s49 = sphi 0, %s46
      %s50 = sphi 0, %s49
      %s66 = sphi 0, %s50
      %s72 = sphi 0, %s74
      %s75 = sphi 0, %s72
      %s76 = sphi 0, %s75
      %s92 = sphi 0, %s76
      %s100 = sphi 0, %s102
      %s103 = sphi 0, %s100
      %s104 = sphi 0, %s103
      %s120 = sphi 0, %s104
      %s128 = sphi 0, %s130
      %s131 = sphi 0, %s128
      %s132 = sphi 0, %s131
      %s148 = sphi 0, %s132
      %s156 = sphi 0, %s158
      %s159 = sphi 0, %s156
      %s160 = sphi 0, %s159
      %s176 = sphi 0, %s160
      %s184 = sphi 0, %s186
      %s187 = sphi 0, %s184
      %s188 = sphi 0, %s187
      %s204 = sphi 0, %s188
    $region4: #{tpu_custom_call.1} parent=1 // loop_header_branch
      %27 = sbr.rel (%p25) target = $region8
    $region5: #{tpu_custom_call.1} parent=1 // loop_body
      %s29 = ssub.s32 %s24, 1
      %s30 = ssub.s32 %s24, 2
      %s37 = sadd.s32 1, %s32
      %p38 = scmp.ge.s32.totalorder %s37, 2
      %s39 = scalar_select %p38, 0, %s37
      %s40 = sadd.s32 1, %s31
      %s41 = scalar_select %p38, %s40, %s31
      %p42 = scmp.ge.s32.totalorder %s41, 2
      %s43 = scalar_select %p42, 0, %s41
      %s44 = ssub.s32 %s31, %s43
      %p45 = scmp.eq.s32.totalorder %s44, 0
      %s47 = sadd.s32 %s46, 1
      %s48 = scalar_select %p45, %s46, %s47
      %p51 = pneg %p45
      %p52 = scmp.eq.s32.totalorder %s24, 3
      %p53 = por %p51, %p52
      %p54 = scmp.ne.s32.totalorder %s46, %s49
      %p55 = scmp.eq.s32.totalorder %s24, 0
      %p56 = por %p54, %p55
      %p57 = scmp.ne.s32.totalorder %s46, %s49
      %p58 = scmp.eq.s32.totalorder %s29, 3
      %p59 = por %p57, %p58
      %p60 = scmp.ne.s32.totalorder %s49, %s50
      %p61 = scmp.eq.s32.totalorder %s29, 0
      %p62 = por %p60, %p61
      %p63 = scmp.ne.s32.totalorder %s49, %s50
      %p64 = scmp.eq.s32.totalorder %s30, 3
      %p65 = por %p63, %p64
      %p67 = scmp.ne.s32.totalorder %s50, %s66
      %p68 = scmp.eq.s32.totalorder %s30, 0
      %p69 = por %p67, %p68
      %s70 = ssub.s32 %s31, %s43
      %p71 = scmp.eq.s32.totalorder %s70, 0
      %s73 = sadd.s32 %s72, 1
      %s74 = scalar_select %p71, %s72, %s73
      %p77 = pneg %p71
      %p78 = scmp.eq.s32.totalorder %s24, 3
      %p79 = por %p77, %p78
      %p80 = scmp.ne.s32.totalorder %s72, %s75
      %p81 = scmp.eq.s32.totalorder %s24, 0
      %p82 = por %p80, %p81
      %p83 = scmp.ne.s32.totalorder %s72, %s75
      %p84 = scmp.eq.s32.totalorder %s29, 3
      %p85 = por %p83, %p84
      %p86 = scmp.ne.s32.totalorder %s75, %s76
      %p87 = scmp.eq.s32.totalorder %s29, 0
      %p88 = por %p86, %p87
      %p89 = scmp.ne.s32.totalorder %s75, %s76
      %p90 = scmp.eq.s32.totalorder %s30, 3
      %p91 = por %p89, %p90
      %p93 = scmp.ne.s32.totalorder %s76, %s92
      %p94 = scmp.eq.s32.totalorder %s30, 0
      %p95 = por %p93, %p94
      %s96 = ssub.s32 %s31, %s43
      %s97 = ssub.s32 %s32, %s39
      %s98 = sor.u32 %s96, %s97
      %p99 = scmp.eq.s32.totalorder %s98, 0
      %s101 = sadd.s32 %s100, 1
      %s102 = scalar_select %p99, %s100, %s101
      %p105 = pneg %p99
      %p106 = scmp.eq.s32.totalorder %s24, 3
      %p107 = por %p105, %p106
      %p108 = scmp.ne.s32.totalorder %s100, %s103
      %p109 = scmp.eq.s32.totalorder %s24, 0
      %p110 = por %p108, %p109
      %p111 = scmp.ne.s32.totalorder %s100, %s103
      %p112 = scmp.eq.s32.totalorder %s29, 3
      %p113 = por %p111, %p112
      %p114 = scmp.ne.s32.totalorder %s103, %s104
      %p115 = scmp.eq.s32.totalorder %s29, 0
      %p116 = por %p114, %p115
      %p117 = scmp.ne.s32.totalorder %s103, %s104
      %p118 = scmp.eq.s32.totalorder %s30, 3
      %p119 = por %p117, %p118
      %p121 = scmp.ne.s32.totalorder %s104, %s120
      %p122 = scmp.eq.s32.totalorder %s30, 0
      %p123 = por %p121, %p122
      %s124 = ssub.s32 %s31, %s43
      %s125 = ssub.s32 %s32, %s39
      %s126 = sor.u32 %s124, %s125
      %p127 = scmp.eq.s32.totalorder %s126, 0
      %s129 = sadd.s32 %s128, 1
      %s130 = scalar_select %p127, %s128, %s129
      %p133 = pneg %p127
      %p134 = scmp.eq.s32.totalorder %s24, 3
      %p135 = por %p133, %p134
      %p136 = scmp.ne.s32.totalorder %s128, %s131
      %p137 = scmp.eq.s32.totalorder %s24, 0
      %p138 = por %p136, %p137
      %p139 = scmp.ne.s32.totalorder %s128, %s131
      %p140 = scmp.eq.s32.totalorder %s29, 3
      %p141 = por %p139, %p140
      %p142 = scmp.ne.s32.totalorder %s131, %s132
      %p143 = scmp.eq.s32.totalorder %s29, 0
      %p144 = por %p142, %p143
      %p145 = scmp.ne.s32.totalorder %s131, %s132
      %p146 = scmp.eq.s32.totalorder %s30, 3
      %p147 = por %p145, %p146
      %p149 = scmp.ne.s32.totalorder %s132, %s148
      %p150 = scmp.eq.s32.totalorder %s30, 0
      %p151 = por %p149, %p150
      %s152 = ssub.s32 %s31, %s43
      %s153 = ssub.s32 %s32, %s39
      %s154 = sor.u32 %s152, %s153
      %p155 = scmp.eq.s32.totalorder %s154, 0
      %s157 = sadd.s32 %s156, 1
      %s158 = scalar_select %p155, %s156, %s157
      %p161 = pneg %p155
      %p162 = scmp.eq.s32.totalorder %s24, 3
      %p163 = por %p161, %p162
      %p164 = scmp.ne.s32.totalorder %s156, %s159
      %p165 = scmp.eq.s32.totalorder %s24, 0
      %p166 = por %p164, %p165
      %p167 = scmp.ne.s32.totalorder %s156, %s159
      %p168 = scmp.eq.s32.totalorder %s29, 3
      %p169 = por %p167, %p168
      %p170 = scmp.ne.s32.totalorder %s159, %s160
      %p171 = scmp.eq.s32.totalorder %s29, 0
      %p172 = por %p170, %p171
      %p173 = scmp.ne.s32.totalorder %s159, %s160
      %p174 = scmp.eq.s32.totalorder %s30, 3
      %p175 = por %p173, %p174
      %p177 = scmp.ne.s32.totalorder %s160, %s176
      %p178 = scmp.eq.s32.totalorder %s30, 0
      %p179 = por %p177, %p178
      %s180 = ssub.s32 %s31, %s43
      %s181 = ssub.s32 %s32, %s39
      %s182 = sor.u32 %s180, %s181
      %p183 = scmp.eq.s32.totalorder %s182, 0
      %s185 = sadd.s32 %s184, 1
      %s186 = scalar_select %p183, %s184, %s185
      %p189 = pneg %p183
      %p190 = scmp.eq.s32.totalorder %s24, 3
      %p191 = por %p189, %p190
      %p192 = scmp.ne.s32.totalorder %s184, %s187
      %p193 = scmp.eq.s32.totalorder %s24, 0
      %p194 = por %p192, %p193
      %p195 = scmp.ne.s32.totalorder %s184, %s187
      %p196 = scmp.eq.s32.totalorder %s29, 3
      %p197 = por %p195, %p196
      %p198 = scmp.ne.s32.totalorder %s187, %s188
      %p199 = scmp.eq.s32.totalorder %s29, 0
      %p200 = por %p198, %p199
      %p201 = scmp.ne.s32.totalorder %s187, %s188
      %p202 = scmp.eq.s32.totalorder %s30, 3
      %p203 = por %p201, %p202
      %p205 = scmp.ne.s32.totalorder %s188, %s204
      %p206 = scmp.eq.s32.totalorder %s30, 0
      %p207 = por %p205, %p206
      %p208 = scmp.le.s32.totalorder 1, %s24
      %p209 = scmp.lt.s32.totalorder %s24, 5
      %p210 = pnand %p208, %p209
      %p211 = pneg %p210
      // Predicated region
      $region9: #{tpu_custom_call.1} parent=5 // pred_check
        _
      $region10: #{tpu_custom_call.1} parent=5 // pred_check_branch
        %213 = sbr.rel (%p210) target = $region12
      $region11: #{tpu_custom_call.1} parent=5 // pred_region
        %s214 = ssub.s32 %s24, 1
      $region12: #{tpu_custom_call.1} parent=5 // pred_fallthru
        _
      %p215 = scmp.lt.s32.totalorder %s24, 4
      // Predicated region
      $region13: #{tpu_custom_call.1} parent=5 // pred_check
        %p216 = pneg %p215
      $region14: #{tpu_custom_call.1} parent=5 // pred_check_branch
        %218 = sbr.rel (%p216) target = $region16
      $region15: #{tpu_custom_call.1} parent=5 // pred_region
        // Predicated region
        $region17: #{tpu_custom_call.1} parent=15 // pred_check
          %p219 = pneg %p56
        $region18: #{tpu_custom_call.1} parent=15 // pred_check_branch
          %221 = sbr.rel (%p219) target = $region20
        $region19: #{tpu_custom_call.1} parent=15 // pred_region
          %p222 = scmp.lt.s32.totalorder %s31, 1
          %s223 = scalar_select %p222, %s31, 1
          %s224 = smul.addr %s223, 8
          %s225 = scalar_lea.vmem %s0, %s224
        $region20: #{tpu_custom_call.1} parent=15 // pred_fallthru
          _
        // Predicated region
        $region21: #{tpu_custom_call.1} parent=15 // pred_check
          %p226 = pneg %p82
        $region22: #{tpu_custom_call.1} parent=15 // pred_check_branch
          %228 = sbr.rel (%p226) target = $region24
        $region23: #{tpu_custom_call.1} parent=15 // pred_region
          %p229 = scmp.lt.s32.totalorder %s31, 1
          %s230 = scalar_select %p229, %s31, 1
          %s231 = smul.addr %s230, 2
          %s232 = smul.addr %s231, 8
          %s233 = scalar_lea.vmem %s1, %s232
        $region24: #{tpu_custom_call.1} parent=15 // pred_fallthru
          _
        // Predicated region
        $region25: #{tpu_custom_call.1} parent=15 // pred_check
          %p234 = pneg %p110
        $region26: #{tpu_custom_call.1} parent=15 // pred_check_branch
          %236 = sbr.rel (%p234) target = $region28
        $region27: #{tpu_custom_call.1} parent=15 // pred_region
          %s237 = sand.u32 %s100, 1
          %s238 = scalar_lea.sflag [#allocation3], %s237
          %s239 = sand.u32 %s100, 1
          %s240 = smul.addr %s239, 32
          %s241 = scalar_lea.vmem [#allocation2], %s240
          %s243 = ssub.s32 512, 512
          %244 = vsyncadd %s238, %s243
          %s245 = smul.addr %s31, 8
          %s246 = sadd.s32 %s32, %s245
          %s247 = smul.addr %s246, 128
          %s248 = scalar_lea.hbm %s2, %s247
          %s249 = sshll.u32 %s241, 4
          %s250 = int_to_ptr.vmem [resolvable:$true] %s249
          %255 = dma.hbm_to_vmem [thread:$0]  %s248, 512, %s250, %s238, 256, 128, 8
        $region28: #{tpu_custom_call.1} parent=15 // pred_fallthru
          _
        // Predicated region
        $region29: #{tpu_custom_call.1} parent=15 // pred_check
          %p256 = pneg %p138
        $region30: #{tpu_custom_call.1} parent=15 // pred_check_branch
          %258 = sbr.rel (%p256) target = $region32
        $region31: #{tpu_custom_call.1} parent=15 // pred_region
          %s259 = sand.u32 %s128, 1
          %s260 = scalar_lea.sflag [#allocation6], %s259
          %s261 = sand.u32 %s128, 1
          %s262 = smul.addr %s261, 16
          %s263 = scalar_lea.vmem [#allocation5], %s262
          %s265 = ssub.s32 256, 256
          %266 = vsyncadd %s260, %s265
          %s267 = smul.addr %s31, 4
          %s268 = sadd.s32 %s32, %s267
          %s269 = smul.addr %s268, 128
          %s270 = scalar_lea.hbm %s3, %s269
          %s271 = sshll.u32 %s263, 4
          %s272 = int_to_ptr.vmem [resolvable:$true] %s271
          %277 = dma.hbm_to_vmem [thread:$0]  %s270, 256, %s272, %s260, 256, 128, 8
        $region32: #{tpu_custom_call.1} parent=15 // pred_fallthru
          _
      $region16: #{tpu_custom_call.1} parent=5 // pred_fallthru
        _
      %p278 = scmp.le.s32.totalorder 1, %s24
      %p279 = scmp.lt.s32.totalorder %s24, 5
      %p280 = pnand %p278, %p279
      %p281 = pneg %p280
      // Predicated region
      $region33: #{tpu_custom_call.1} parent=5 // pred_check
        _
      $region34: #{tpu_custom_call.1} parent=5 // pred_check_branch
        %283 = sbr.rel (%p280) target = $region36
      $region35: #{tpu_custom_call.1} parent=5 // pred_region
        %s284 = ssub.s32 %s24, 1
        %s285 = sand.u32 %s103, 1
        %s286 = scalar_lea.sflag [#allocation3], %s285
        %s287 = sand.u32 %s103, 1
        %s288 = smul.addr %s287, 32
        %s289 = scalar_lea.vmem [#allocation2], %s288
        // Predicated region
        $region37: #{tpu_custom_call.1} parent=35 // pred_check
          %p290 = pneg %p116
        $region38: #{tpu_custom_call.1} parent=35 // pred_check_branch
          %292 = sbr.rel (%p290) target = $region40
        $region39: #{tpu_custom_call.1} parent=35 // pred_region
          %293 = dma.done %s286, 512
        $region40: #{tpu_custom_call.1} parent=35 // pred_fallthru
          _
        %s294 = sand.u32 %s131, 1
        %s295 = scalar_lea.sflag [#allocation6], %s294
        %s296 = sand.u32 %s131, 1
        %s297 = smul.addr %s296, 16
        %s298 = scalar_lea.vmem [#allocation5], %s297
        // Predicated region
        $region41: #{tpu_custom_call.1} parent=35 // pred_check
          %p299 = pneg %p144
        $region42: #{tpu_custom_call.1} parent=35 // pred_check_branch
          %301 = sbr.rel (%p299) target = $region44
        $region43: #{tpu_custom_call.1} parent=35 // pred_region
          %302 = dma.done %s295, 256
        $region44: #{tpu_custom_call.1} parent=35 // pred_fallthru
          _
        %p303 = scmp.lt.s32.totalorder %s33, 1
        %s304 = scalar_select %p303, %s33, 1
        %s305 = smul.addr %s304, 8
        %s306 = scalar_lea.vmem %s0, %s305
        %p307 = pneg %p62
        %p308 = pneg %p59
        %p309 = scmp.lt.s32.totalorder %s33, 1
        %s310 = scalar_select %p309, %s33, 1
        %s311 = smul.addr %s310, 2
        %s312 = smul.addr %s311, 8
        %s313 = scalar_lea.vmem %s1, %s312
        %p314 = pneg %p88
        %p315 = pneg %p85
        %s316 = sand.u32 %s103, 1
        %s317 = scalar_lea.sflag [#allocation3], %s316
        %s318 = sand.u32 %s103, 1
        %s319 = smul.addr %s318, 32
        %s320 = scalar_lea.vmem [#allocation2], %s319
        %p321 = pneg %p116
        %p322 = pneg %p113
        %s323 = sand.u32 %s131, 1
        %s324 = scalar_lea.sflag [#allocation6], %s323
        %s325 = sand.u32 %s131, 1
        %s326 = smul.addr %s325, 16
        %s327 = scalar_lea.vmem [#allocation5], %s326
        %p328 = pneg %p144
        %p329 = pneg %p141
        %p330 = pneg %p172
        %p331 = pneg %p169
        %s332 = sand.u32 %s159, 1
        %s333 = scalar_lea.sflag [#allocation4], %s332
        %s334 = sand.u32 %s159, 1
        %s335 = smul.addr %s334, 8
        %s336 = scalar_lea.vmem [#allocation7], %s335
        %p337 = pneg %p200
        %p338 = pneg %p197
        %s339 = sand.u32 %s187, 1
        %s340 = scalar_lea.sflag [#allocation9], %s339
        %s341 = sand.u32 %s187, 1
        %s342 = smul.addr %s341, 32
        %s343 = scalar_lea.vmem [#allocation8], %s342
        %p344 = scmp.lt.s32.totalorder %s33, 1
        %s345 = scalar_select %p344, %s33, 1
        %s346 = smul.addr %s345, 8
        %s347 = scalar_lea.vmem %s0, %s346
        %p348 = scmp.lt.s32.totalorder %s33, 1
        %s349 = scalar_select %p348, %s33, 1
        %s350 = smul.addr %s349, 2
        %s351 = smul.addr %s350, 8
        %s352 = scalar_lea.vmem %s1, %s351
        %v353 = vld [vmem:[%s347] sm:$0xff]
        %v354 = vld [vmem:[%s289] sm:$0xff]
        %v355 = vld [vmem:[%s289 + $0x8] sm:$0xff]
        %v356 = vld [vmem:[%s289 + $0x10] sm:$0xff]
        %v357 = vld [vmem:[%s289 + $0x18] sm:$0xff]
        %vm358 = vcmask 261120
        %v360 = vsel %vm358, %v353, 0
        %362 = vmatprep.subr.mxu0 0.0
        %363 = vmatpush1.msra.mxu0 %v354
        %364 = vmatprep.subr.mxu0 0.0
        %365 = vmatpush1.msra.mxu0 %v355
        %366 = vmatprep.subr.mxu0 0.0
        %367 = vmatpush1.msra.mxu0 %v356
        %368 = vmatprep.subr.mxu0 0.0
        %369 = vmatpush1.msra.mxu0 %v357
        %370 = vmatprep.subr.mxu0 0.0
        %371 = vmatpush1.msra.mxu0 0.0
        %372 = vmatprep.subr.mxu0 0.0
        %373 = vmatpush1.msra.mxu0 0.0
        %374 = vmatprep.subr.mxu0 0.0
        %375 = vmatpush1.msra.mxu0 0.0
        %376 = vmatprep.subr.mxu0 0.0
        %377 = vmatpush1.msra.mxu0 0.0
        %378 = vmatprep.subr.mxu0 0.0
        %379 = vmatpush1.msra.mxu0 0.0
        %380 = vmatprep.subr.mxu0 0.0
        %381 = vmatpush1.msra.mxu0 0.0
        %382 = vmatprep.subr.mxu0 0.0
        %383 = vmatpush1.msra.mxu0 0.0
        %384 = vmatprep.subr.mxu0 0.0
        %385 = vmatpush1.msra.mxu0 0.0
        %386 = vmatprep.subr.mxu0 0.0
        %387 = vmatpush1.msra.mxu0 0.0
        %388 = vmatprep.subr.mxu0 0.0
        %389 = vmatpush1.msra.mxu0 0.0
        %390 = vmatprep.subr.mxu0 0.0
        %391 = vmatpush1.msra.mxu0 0.0
        %392 = vmatprep.subr.mxu0 0.0
        %393 = vmatpush1.msra.mxu0 0.0
        %394 = vmatprep.subr.mxu0 0.0
        %395 = vmatpush1.msra.mxu0 0.0
        %396 = vmatprep.subr.mxu0 0.0
        %397 = vmatpush1.msra.mxu0 0.0
        %398 = vmatprep.subr.mxu0 0.0
        %399 = vmatpush1.msra.mxu0 0.0
        %400 = vmatprep.subr.mxu0 0.0
        %401 = vmatpush1.msra.mxu0 0.0
        %402 = vmatprep.subr.mxu0 0.0
        %403 = vmatpush1.msra.mxu0 0.0
        %404 = vmatprep.subr.mxu0 0.0
        %405 = vmatpush1.msra.mxu0 0.0
        %406 = vmatprep.subr.mxu0 0.0
        %407 = vmatpush1.msra.mxu0 0.0
        %408 = vmatprep.subr.mxu0 0.0
        %409 = vmatpush1.msra.mxu0 0.0
        %410 = vmatprep.subr.mxu0 0.0
        %411 = vmatpush1.msra.mxu0 0.0
        %412 = vmatprep.subr.mxu0 0.0
        %413 = vmatpush1.msra.mxu0 0.0
        %414 = vmatprep.subr.mxu0 0.0
        %415 = vmatpush1.msra.mxu0 0.0
        %416 = vmatprep.subr.mxu0 0.0
        %417 = vmatpush1.msra.mxu0 0.0
        %418 = vmatprep.subr.mxu0 0.0
        %419 = vmatpush1.msra.mxu0 0.0
        %420 = vmatprep.subr.mxu0 0.0
        %421 = vmatpush1.msra.mxu0 0.0
        %422 = vmatprep.subr.mxu0 0.0
        %423 = vmatpush1.msra.mxu0 0.0
        %424 = vmatprep.subr.mxu0 0.0
        %425 = vmatpush1.msra.mxu0 0.0
        %426 = vmatprep.mubr.f32.mxu0 0.0
        %427 = vmatmul.mubr.f32.gmra.mrb[0].mxu0 %v360
        %v428 = vpop.f32.mrb[0].mxu0
        %v429 = vadd.f32 0.0, %v428
        %v430 = vpop.f32.mrb[0].mxu0
        %431 = vdwg.mxu0
        %v432 = vrot.slane %v429, 4
        %v433 = vmax.f32 %v429, %v432
        %v434 = vrot.slane %v433, 2
        %v435 = vmax.f32 %v433, %v434
        %v436 = vrot.slane %v435, 1
        %v437 = vmax.f32 %v435, %v436
        %v438 = vsub.f32 %v429, %v437
        %v439 = vmul.f32 %v438, 1.442695
        %v440 = vpow.pop %v439
        %v441 = vrot.slane %v440, 4
        %v442 = vadd.f32 %v440, %v441
        %v443 = vrot.slane %v442, 2
        %v444 = vadd.f32 %v442, %v443
        %v445 = vrot.slane %v444, 1
        %v446 = vadd.f32 %v444, %v445
        %v447 = vrcp.pop %v446
        %v448 = vmul.f32 %v440, %v447
        %449 = vst [vmem:[%s336] sm:$0xff] %v448
        %v450 = vld [vmem:[%s352] sm:$0xff]
        %v451 = vld [vmem:[%s352 + $0x8] sm:$0xff]
        %vm452 = vcmask 64512
        %v454 = vsel %vm452, %v450, 0
        %v457 = vsel %vm452, %v451, 0
        %459 = vmatprep.subr.mxu0 0.0
        %460 = vmatpush1.msra.mxu0 %v448
        %461 = vmatprep.subr.mxu0 0.0
        %462 = vmatpush1.msra.mxu0 0.0
        %463 = vmatprep.subr.mxu0 0.0
        %464 = vmatpush1.msra.mxu0 0.0
        %465 = vmatprep.subr.mxu0 0.0
        %466 = vmatpush1.msra.mxu0 0.0
        %467 = vmatprep.subr.mxu0 0.0
        %468 = vmatpush1.msra.mxu0 0.0
        %469 = vmatprep.subr.mxu0 0.0
        %470 = vmatpush1.msra.mxu0 0.0
        %471 = vmatprep.subr.mxu0 0.0
        %472 = vmatpush1.msra.mxu0 0.0
        %473 = vmatprep.subr.mxu0 0.0
        %474 = vmatpush1.msra.mxu0 0.0
        %475 = vmatprep.subr.mxu0 0.0
        %476 = vmatpush1.msra.mxu0 0.0
        %477 = vmatprep.subr.mxu0 0.0
        %478 = vmatpush1.msra.mxu0 0.0
        %479 = vmatprep.subr.mxu0 0.0
        %480 = vmatpush1.msra.mxu0 0.0
        %481 = vmatprep.subr.mxu0 0.0
        %482 = vmatpush1.msra.mxu0 0.0
        %483 = vmatprep.subr.mxu0 0.0
        %484 = vmatpush1.msra.mxu0 0.0
        %485 = vmatprep.subr.mxu0 0.0
        %486 = vmatpush1.msra.mxu0 0.0
        %487 = vmatprep.subr.mxu0 0.0
        %488 = vmatpush1.msra.mxu0 0.0
        %489 = vmatprep.subr.mxu0 0.0
        %490 = vmatpush1.msra.mxu0 0.0
        %491 = vmatprep.subr.mxu0 0.0
        %492 = vmatpush1.msra.mxu0 0.0
        %493 = vmatprep.subr.mxu0 0.0
        %494 = vmatpush1.msra.mxu0 0.0
        %495 = vmatprep.subr.mxu0 0.0
        %496 = vmatpush1.msra.mxu0 0.0
        %497 = vmatprep.subr.mxu0 0.0
        %498 = vmatpush1.msra.mxu0 0.0
        %499 = vmatprep.subr.mxu0 0.0
        %500 = vmatpush1.msra.mxu0 0.0
        %501 = vmatprep.subr.mxu0 0.0
        %502 = vmatpush1.msra.mxu0 0.0
        %503 = vmatprep.subr.mxu0 0.0
        %504 = vmatpush1.msra.mxu0 0.0
        %505 = vmatprep.subr.mxu0 0.0
        %506 = vmatpush1.msra.mxu0 0.0
        %507 = vmatprep.subr.mxu0 0.0
        %508 = vmatpush1.msra.mxu0 0.0
        %509 = vmatprep.subr.mxu0 0.0
        %510 = vmatpush1.msra.mxu0 0.0
        %511 = vmatprep.subr.mxu0 0.0
        %512 = vmatpush1.msra.mxu0 0.0
        %513 = vmatprep.subr.mxu0 0.0
        %514 = vmatpush1.msra.mxu0 0.0
        %515 = vmatprep.subr.mxu0 0.0
        %516 = vmatpush1.msra.mxu0 0.0
        %517 = vmatprep.subr.mxu0 0.0
        %518 = vmatpush1.msra.mxu0 0.0
        %519 = vmatprep.subr.mxu0 0.0
        %520 = vmatpush1.msra.mxu0 0.0
        %521 = vmatprep.subr.mxu0 0.0
        %522 = vmatpush1.msra.mxu0 0.0
        %523 = vmatprep.mubr.f32.mxu0 0.0
        %524 = vmatmul.mubr.f32.gmra.mrb[0].mxu0 %v454
        %v525 = vpop.f32.mrb[0].mxu0
        %v526 = vadd.f32 0.0, %v525
        %v527 = vpop.f32.mrb[0].mxu0
        %528 = vmatprep.mubr.f32.mxu0 0.0
        %529 = vmatmul.mubr.f32.gmra.mrb[0].mxu0 %v457
        %v530 = vpop.f32.mrb[0].mxu0
        %v531 = vadd.f32 0.0, %v530
        %v532 = vpop.f32.mrb[0].mxu0
        %533 = vdwg.mxu0
        %534 = vst [vmem:[%s343] sm:$0xff] %v526
        %535 = vst [vmem:[%s343 + $0x8] sm:$0xff] %v531
        %v536 = vld [vmem:[%s298] sm:$0xff]
        %v537 = vld [vmem:[%s298 + $0x8] sm:$0xff]
        %538 = vst [vmem:[%s343 + $0x10] sm:$0xff] %v536
        %539 = vst [vmem:[%s343 + $0x18] sm:$0xff] %v537
        %s540 = sand.u32 %s159, 1
        %s541 = scalar_lea.sflag [#allocation4], %s540
        %s542 = sand.u32 %s159, 1
        %s543 = smul.addr %s542, 8
        %s544 = scalar_lea.vmem [#allocation7], %s543
        %s545 = sand.u32 %s187, 1
        %s546 = scalar_lea.sflag [#allocation9], %s545
        %s547 = sand.u32 %s187, 1
        %s548 = smul.addr %s547, 32
        %s549 = scalar_lea.vmem [#allocation8], %s548
        // Predicated region
        $region45: #{tpu_custom_call.1} parent=35 // pred_check
          %p550 = pneg %p169
        $region46: #{tpu_custom_call.1} parent=35 // pred_check_branch
          %552 = sbr.rel (%p550) target = $region48
        $region47: #{tpu_custom_call.1} parent=35 // pred_region
          %s554 = ssub.s32 128, 128
          %555 = vsyncadd %s541, %s554
          %s556 = smul.addr %s33, 2
          %s557 = sadd.s32 %s34, %s556
          %s558 = smul.addr %s557, 128
          %s559 = scalar_lea.hbm %s4, %s558
          %s561 = sshll.u32 %s544, 4
          %s562 = int_to_ptr.vmem [resolvable:$true] %s561
          %564 = dma.vmem_to_hbm [thread:$0]  %s562, 128, %s559, %s541
        $region48: #{tpu_custom_call.1} parent=35 // pred_fallthru
          _
        // Predicated region
        $region49: #{tpu_custom_call.1} parent=35 // pred_check
          %p565 = pneg %p197
        $region50: #{tpu_custom_call.1} parent=35 // pred_check_branch
          %567 = sbr.rel (%p565) target = $region52
        $region51: #{tpu_custom_call.1} parent=35 // pred_region
          %s569 = ssub.s32 512, 512
          %570 = vsyncadd %s546, %s569
          %s571 = smul.addr %s33, 8
          %s572 = sadd.s32 %s34, %s571
          %s573 = smul.addr %s572, 128
          %s574 = scalar_lea.hbm %s5, %s573
          %s575 = sshll.u32 %s549, 4
          %s576 = int_to_ptr.vmem [resolvable:$true] %s575
          %581 = dma.vmem_to_hbm [thread:$0]  %s576, 512, %s574, %s546, 128, 256, 8
        $region52: #{tpu_custom_call.1} parent=35 // pred_fallthru
          _
      $region36: #{tpu_custom_call.1} parent=5 // pred_fallthru
        _
      %p582 = scmp.le.s32.totalorder 2, %s24
      // Predicated region
      $region53: #{tpu_custom_call.1} parent=5 // pred_check
        %p583 = pneg %p582
      $region54: #{tpu_custom_call.1} parent=5 // pred_check_branch
        %585 = sbr.rel (%p583) target = $region56
      $region55: #{tpu_custom_call.1} parent=5 // pred_region
        %s586 = ssub.s32 %s24, 2
        // Predicated region
        $region57: #{tpu_custom_call.1} parent=55 // pred_check
          %p587 = pneg %p175
        $region58: #{tpu_custom_call.1} parent=55 // pred_check_branch
          %589 = sbr.rel (%p587) target = $region60
        $region59: #{tpu_custom_call.1} parent=55 // pred_region
          %s590 = sand.u32 %s160, 1
          %s591 = scalar_lea.sflag [#allocation4], %s590
          %s592 = sand.u32 %s160, 1
          %s593 = smul.addr %s592, 8
          %s594 = scalar_lea.vmem [#allocation7], %s593
          %595 = dma.done %s591, 128
        $region60: #{tpu_custom_call.1} parent=55 // pred_fallthru
          _
        // Predicated region
        $region61: #{tpu_custom_call.1} parent=55 // pred_check
          %p596 = pneg %p203
        $region62: #{tpu_custom_call.1} parent=55 // pred_check_branch
          %598 = sbr.rel (%p596) target = $region64
        $region63: #{tpu_custom_call.1} parent=55 // pred_region
          %s599 = sand.u32 %s188, 1
          %s600 = scalar_lea.sflag [#allocation9], %s599
          %s601 = sand.u32 %s188, 1
          %s602 = smul.addr %s601, 32
          %s603 = scalar_lea.vmem [#allocation8], %s602
          %604 = dma.done %s600, 512
        $region64: #{tpu_custom_call.1} parent=55 // pred_fallthru
          _
      $region56: #{tpu_custom_call.1} parent=5 // pred_fallthru
        _
    $region6: #{tpu_custom_call.1} parent=1 // loop_footer
      %s28 = sadd.s32 1, %s24
    $region7: #{tpu_custom_call.1} parent=1 // loop_footer_branch
      %23 = sbr.rel target = $region3
    $region8: #{tpu_custom_call.1} parent=1 // loop_exit
      _
    %605 = vsyncpa [#allocation3], 1
    %s606 = scalar_lea.sflag [#allocation3], 1
    %607 = vsyncpa %s606, 1
    %608 = vsyncpa [#allocation6], 1
    %s609 = scalar_lea.sflag [#allocation6], 1
    %610 = vsyncpa %s609, 1
    %611 = vsyncpa [#allocation4], 1
    %s612 = scalar_lea.sflag [#allocation4], 1
    %613 = vsyncpa %s612, 1
    %614 = vsyncpa [#allocation9], 1
    %s615 = scalar_lea.sflag [#allocation9], 1
    %616 = vsyncpa %s615, 1

</llo_original>
